<compile_context>
chip_gen: v7x
topology: tpu7x:2x2x1
jax: 0.10.0
libtpu: 0.0.40
codegen_flags: <defaults>
</compile_context>

<pallas_src>
import functools

import jax
import jax.numpy as jnp
from jax.experimental import pallas as pl
from jax.experimental.pallas import tpu as pltpu


_LANE = 128
_SUBLANE = 8


def _round_up(a: int, b: int) -> int:
    return (a + b - 1) // b * b


def _largest_tile_divisor(dim: int, target: int, quantum: int = _LANE) -> int:
    """Largest multiple of `quantum` that divides `dim` and is <= `target`.

    `dim` is a multiple of `quantum`, so `quantum` itself always works.
    """
    best = quantum
    t = quantum
    while t <= min(target, dim):
        if dim % t == 0:
            best = t
        t += quantum
    return best


@functools.lru_cache(maxsize=1)
def _vmem_capacity_bytes() -> int:
    try:
        return int(pltpu.get_tpu_info().vmem_capacity_bytes)
    except Exception:
        return 64 * 1024 * 1024  # conservative (v7x-class) fallback


def _ffn_tiles(Ip: int, ti_override):
    """Return (tm_target, ti_eff, vmem_limit_bytes) for the current chip generation."""
    vmem = _vmem_capacity_bytes()
    if vmem <= 64 * 1024 * 1024:
        # v7x-class (64 MiB VMEM): smaller weight tiles, leave ~8 MiB headroom.
        tm_target, ti_target, vmem_limit = 512, 256, 56 * 1024 * 1024
    else:
        # v5e / v6e (128 MiB VMEM): bigger weight tiles, raise the scoped limit.
        tm_target, ti_target, vmem_limit = 512, 512, 100 * 1024 * 1024
    if ti_override is not None:
        ti_target = ti_override
    ti_eff = _largest_tile_divisor(Ip, ti_target)
    return tm_target, ti_eff, vmem_limit


def pack_ffn_weights(w_gate, w_up, w_down, *, ti=None):
    """One-time weight preparation (keep OUT of the per-call hot path).

    Weights are stored [in_features, out_features] (x @ W convention).
    Returns:
      w_gu     : (Hp, 2*Ip) bf16, block j (width 2*ti) is [gate_j | up_j]
      w_down_p : (Ip, Hp)   bf16
    """
    H, I = w_gate.shape
    Hp = _round_up(H, _LANE)
    Ip = _round_up(I, _LANE)
    _, ti_eff, _ = _ffn_tiles(Ip, ti)
    n_j = Ip // ti_eff
    cdt = jnp.bfloat16
    wg = jnp.pad(w_gate.astype(cdt), ((0, Hp - H), (0, Ip - I)))
    wu = jnp.pad(w_up.astype(cdt), ((0, Hp - H), (0, Ip - I)))
    wd = jnp.pad(w_down.astype(cdt), ((0, Ip - I), (0, Hp - H)))
    w_gu = jnp.concatenate(
        [wg.reshape(Hp, n_j, ti_eff), wu.reshape(Hp, n_j, ti_eff)], axis=2
    ).reshape(Hp, 2 * Ip)
    return w_gu, wd


def _ffn_kernel_acc(x_ref, wgu_ref, wd_ref, o_ref, acc_ref, *, ti: int):
    # Multi-step intermediate reduction: f32 VMEM accumulator, reduction axis last.
    j = pl.program_id(1)

    @pl.when(j == 0)
    def _():
        acc_ref[...] = jnp.zeros_like(acc_ref)

    # Fused gate+up projection: one MXU matmul, f32 accumulation.
    gu = jnp.dot(x_ref[...], wgu_ref[...], preferred_element_type=jnp.float32)
    g = gu[:, :ti]
    u = gu[:, ti:]
    h = (g * jax.nn.sigmoid(g)) * u          # silu(g) * u  (VPU + EUP)
    acc_ref[...] += jnp.dot(h.astype(wd_ref.dtype), wd_ref[...],
                            preferred_element_type=jnp.float32)

    @pl.when(j == pl.num_programs(1) - 1)
    def _():
        o_ref[...] = acc_ref[...].astype(o_ref.dtype)


def _ffn_kernel_single(x_ref, wgu_ref, wd_ref, o_ref, *, ti: int):
    # n_j == 1 fast path: no scratch accumulator, single write to the output tile.
    gu = jnp.dot(x_ref[...], wgu_ref[...], preferred_element_type=jnp.float32)
    g = gu[:, :ti]
    u = gu[:, ti:]
    h = (g * jax.nn.sigmoid(g)) * u
    o_ref[...] = jnp.dot(h.astype(wd_ref.dtype), wd_ref[...],
                         preferred_element_type=jnp.float32).astype(o_ref.dtype)


@functools.partial(jax.jit, static_argnames=("ti",))
def demo_feed_forward(x, w_gu, w_down_p, *, ti=None):
    """x: [B, S, H]; (w_gu, w_down_p) from pack_ffn_weights() with the same `ti`."""
    # TODO(synk): nn.Dropout(p=config.dropout=0.0) is identity here; stochastic
    # dropout (p>0 training mode) is not implemented.
    B, S, H = x.shape
    M = B * S
    Ip, Hp = w_down_p.shape
    if w_gu.shape != (Hp, 2 * Ip) or H > Hp:
        raise ValueError("weights inconsistent with x; use pack_ffn_weights()")

    tm_target, ti_eff, vmem_limit = _ffn_tiles(Ip, ti)
    n_j = Ip // ti_eff

    tm_eff = min(tm_target, _round_up(M, _SUBLANE))
    # Megacore: if one token block would cover all of M, split into two blocks so
    # both TensorCores get work, as long as each half keeps >= 256 rows
    # (staying at/above the weight-reuse roofline crossover).
    if _round_up(M, tm_eff) // tm_eff < 2:
        half = _round_up((M + 1) // 2, _SUBLANE)
        if half >= 256:
            tm_eff = half
    Mp = _round_up(M, tm_eff)
    n_i = Mp // tm_eff

    # Only the activations are padded/cast in the hot path (cheap vs. weights).
    x_p = jnp.pad(x.reshape(M, H).astype(jnp.bfloat16),
                  ((0, Mp - M), (0, Hp - H)))

    if n_j == 1:
        kernel = functools.partial(_ffn_kernel_single, ti=ti_eff)
        scratch_shapes = []
    else:
        kernel = functools.partial(_ffn_kernel_acc, ti=ti_eff)
        scratch_shapes = [pltpu.VMEM((tm_eff, Hp), jnp.float32)]

    weight_bytes = (w_gu.size + w_down_p.size) * w_gu.dtype.itemsize
    cost = pl.CostEstimate(
        flops=6 * Mp * Hp * Ip,
        transcendentals=Mp * Ip,
        bytes_accessed=(x_p.size * x_p.dtype.itemsize     # activations in
                        + n_i * weight_bytes              # weights re-streamed per token tile
                        + Mp * Hp * x.dtype.itemsize),    # output
    )

    out = pl.pallas_call(
        kernel,
        out_shape=jax.ShapeDtypeStruct((Mp, Hp), x.dtype),
        grid_spec=pltpu.PrefetchScalarGridSpec(
            num_scalar_prefetch=0,
            grid=(n_i, n_j),
            in_specs=[
                pl.BlockSpec((tm_eff, Hp), lambda i, j: (i, 0)),       # x tile (resident over j)
                pl.BlockSpec((Hp, 2 * ti_eff), lambda i, j: (0, j)),   # [Wg|Wu] tile
                pl.BlockSpec((ti_eff, Hp), lambda i, j: (j, 0)),       # Wd tile
            ],
            out_specs=pl.BlockSpec((tm_eff, Hp), lambda i, j: (i, 0)),
            scratch_shapes=scratch_shapes,
        ),
        compiler_params=pltpu.CompilerParams(
            dimension_semantics=("parallel", "arbitrary"),
            vmem_limit_bytes=vmem_limit,
        ),
        cost_estimate=cost,
    )(x_p, w_gu, w_down_p)

    return out[:M, :H].reshape(B, S, H)


if __name__ == "__main__":
    def _reference(x, wg, wu, wd):
        g = x @ wg
        u = x @ wu
        return (g * jax.nn.sigmoid(g) * u) @ wd

    key = jax.random.PRNGKey(0)

    # Case 1: demo config (hidden_size=32, intermediate_size=64) -> n_j == 1 fast path.
    B, S, H, I = 2, 8, 32, 64
    kx, kg, ku, kd = jax.random.split(key, 4)
    x = jax.random.normal(kx, (B, S, H), dtype=jnp.float32)
    # Deterministic synthetic weights (~nn.Linear scale), stored [in_features, out_features].
    w_gate = jax.random.uniform(kg, (H, I), jnp.float32, -1.0, 1.0) / (H ** 0.5)
    w_up = jax.random.uniform(ku, (H, I), jnp.float32, -1.0, 1.0) / (H ** 0.5)
    w_down = jax.random.uniform(kd, (I, H), jnp.float32, -1.0, 1.0) / (I ** 0.5)

    w_gu, w_down_p = pack_ffn_weights(w_gate, w_up, w_down)
    y = jax.block_until_ready(demo_feed_forward(x, w_gu, w_down_p))
    y_ref = _reference(x, w_gate, w_up, w_down)
    assert y.shape == y_ref.shape
    # bf16 matmul inputs with f32 accumulation -> loose-ish tolerance vs f32 reference.
    assert jnp.allclose(y, y_ref, atol=3e-2, rtol=3e-2), "case 1 mismatch vs reference"

    # Case 2: larger intermediate with ti=128 override -> exercises the accumulator path.
    B2, S2, H2, I2 = 2, 16, 64, 384
    k2 = jax.random.split(jax.random.PRNGKey(0), 4)
    x2 = jax.random.normal(k2[0], (B2, S2, H2), dtype=jnp.float32)
    wg2 = jax.random.uniform(k2[1], (H2, I2), jnp.float32, -1.0, 1.0) / (H2 ** 0.5)
    wu2 = jax.random.uniform(k2[2], (H2, I2), jnp.float32, -1.0, 1.0) / (H2 ** 0.5)
    wd2 = jax.random.uniform(k2[3], (I2, H2), jnp.float32, -1.0, 1.0) / (I2 ** 0.5)

    w_gu2, w_down_p2 = pack_ffn_weights(wg2, wu2, wd2, ti=128)
    y2 = jax.block_until_ready(demo_feed_forward(x2, w_gu2, w_down_p2, ti=128))
    y2_ref = _reference(x2, wg2, wu2, wd2)
    assert jnp.allclose(y2, y2_ref, atol=5e-2, rtol=5e-2), "case 2 mismatch vs reference"

    print("KERNEL_OK")
</pallas_src>

<mosaic_0001>
module attributes {stable_mosaic.version = 11 : i64} {
  func.func @_ffn_kernel_single(%arg0: i32, %arg1: i32, %arg2: memref<16x128xbf16, #tpu.memory_space<vmem>>, %arg3: memref<128x256xbf16, #tpu.memory_space<vmem>>, %arg4: memref<128x128xbf16, #tpu.memory_space<vmem>>, %arg5: memref<16x128xf32, #tpu.memory_space<vmem>>) attributes {dimension_semantics = [#tpu.dimension_semantics<parallel>, #tpu.dimension_semantics<arbitrary>], iteration_bounds = array<i64: 1, 1>, scalar_prefetch = 0 : i64, scratch_operands = 0 : i64, tpu.core_type = #tpu.core_type<tc>, window_params = [{transform_indices = @transform_0, window_bounds = array<i64: 16, 128>}, {transform_indices = @transform_1, window_bounds = array<i64: 128, 256>}, {transform_indices = @transform_2, window_bounds = array<i64: 128, 128>}, {transform_indices = @transform_3, window_bounds = array<i64: 16, 128>}]} {
    %c0 = arith.constant 0 : index
    %c0_0 = arith.constant 0 : index
    %0 = vector.load %arg2[%c0, %c0_0] : memref<16x128xbf16, #tpu.memory_space<vmem>>, vector<16x128xbf16>
    %c0_1 = arith.constant 0 : index
    %c0_2 = arith.constant 0 : index
    %1 = vector.load %arg3[%c0_1, %c0_2] : memref<128x256xbf16, #tpu.memory_space<vmem>>, vector<128x256xbf16>
    %cst = arith.constant dense<0.000000e+00> : vector<16x256xf32>
    %2 = tpu.matmul %0, %1, %cst {dimension_numbers = #tpu.dot_dimension_numbers<[1], [0], [0], [1], [0, 0, 1, 1], [], []>} : vector<16x128xbf16>, vector<128x256xbf16>, vector<16x256xf32> -> vector<16x256xf32>
    %3 = vector.extract_strided_slice %2 {offsets = [0, 0], sizes = [16, 128], strides = [1, 1]} : vector<16x256xf32> to vector<16x128xf32>
    %4 = vector.extract_strided_slice %2 {offsets = [0, 128], sizes = [16, 128], strides = [1, 1]} : vector<16x256xf32> to vector<16x128xf32>
    %5 = arith.negf %3 : vector<16x128xf32>
    %6 = math.exp %5 : vector<16x128xf32>
    %cst_3 = arith.constant 1.000000e+00 : f32
    %7 = vector.broadcast %cst_3 : f32 to vector<16x128xf32>
    %8 = arith.addf %7, %6 : vector<16x128xf32>
    %9 = arith.divf %7, %8 : vector<16x128xf32>
    %10 = arith.mulf %3, %9 : vector<16x128xf32>
    %11 = arith.mulf %10, %4 : vector<16x128xf32>
    %12 = arith.truncf %11 : vector<16x128xf32> to vector<16x128xbf16>
    %c0_4 = arith.constant 0 : index
    %c0_5 = arith.constant 0 : index
    %13 = vector.load %arg4[%c0_4, %c0_5] : memref<128x128xbf16, #tpu.memory_space<vmem>>, vector<128x128xbf16>
    %cst_6 = arith.constant dense<0.000000e+00> : vector<16x128xf32>
    %14 = tpu.matmul %12, %13, %cst_6 {dimension_numbers = #tpu.dot_dimension_numbers<[1], [0], [0], [1], [0, 0, 1, 1], [], []>} : vector<16x128xbf16>, vector<128x128xbf16>, vector<16x128xf32> -> vector<16x128xf32>
    %c0_7 = arith.constant 0 : index
    %c0_8 = arith.constant 0 : index
    %15 = vector.load %arg5[%c0_7, %c0_8] : memref<16x128xf32, #tpu.memory_space<vmem>>, vector<16x128xf32>
    tpu.vector_store %arg5[%c0_7, %c0_8], %14 {strides = array<i32>} : memref<16x128xf32, #tpu.memory_space<vmem>>, vector<16x128xf32>,
    return
  }
  func.func @transform_0(%arg0: i32, %arg1: i32) -> (i32, i32) {
    %c0_i32 = arith.constant 0 : i32
    %c0_i32_0 = arith.constant 0 : i32
    return %arg0, %c0_i32 : i32, i32
  }
  func.func @transform_1(%arg0: i32, %arg1: i32) -> (i32, i32) {
    %c0_i32 = arith.constant 0 : i32
    %c0_i32_0 = arith.constant 0 : i32
    return %c0_i32, %arg1 : i32, i32
  }
  func.func @transform_2(%arg0: i32, %arg1: i32) -> (i32, i32) {
    %c0_i32 = arith.constant 0 : i32
    %c0_i32_0 = arith.constant 0 : i32
    return %arg1, %c0_i32 : i32, i32
  }
  func.func @transform_3(%arg0: i32, %arg1: i32) -> (i32, i32) {
    %c0_i32 = arith.constant 0 : i32
    %c0_i32_0 = arith.constant 0 : i32
    return %arg0, %c0_i32 : i32, i32
  }
}

</mosaic_0001>

<llo_original>
// kernel: demo_feed_forward.1
$region0: #{demo_feed_forward.1}
  #allocation0 [shape = 'u32[]', space=smem, size = 0x4, offset = 0x4, fixed_abs, tag = 'smem constant byte address 0x4 - core index']
  #allocation1 [shape = 'u32[144,128]{1,0:T(1,128)}', space=vmem, size = 0x12000, scoped, tag = 'internal scratch']
  %s0 = inlined_call_operand.vmem [shape: bf16[16,128], index: 0, kind: input, shape index: {}]
  %s1 = inlined_call_operand.hbm [shape: bf16[128,256], index: 1, kind: input, shape index: {}]
  %s2 = inlined_call_operand.hbm [shape: bf16[128,128], index: 2, kind: input, shape index: {}]
  %s3 = inlined_call_operand.vmem [shape: f32[16,128], index: 3, kind: output, shape index: {}]
  %s4 = sld [smem:[#allocation0]]
  $region30: #{demo_feed_forward.1} parent=0
    _
  %s6 = ssub.s32 1, %s4
  %s7 = scalar_select 0, %s6, %s4
  $region1: #{demo_feed_forward.1} parent=0
    #allocation2 [shape = 'u8[65536]{0}', space=vmem, size = 0x10000, scoped, tag = 'input window, operand 1, single buffered']
    #allocation3 [shape = 's32[1]{0}', space=sflag, size = 0x4, scoped, tag = 'scoped memory for demo_feed_forward.1']
    #allocation4 [shape = 'u8[32768]{0}', space=vmem, size = 0x8000, scoped, tag = 'input window, operand 2, single buffered']
    #allocation5 [shape = 's32[1]{0}', space=sflag, size = 0x4, scoped, tag = 'scoped memory for demo_feed_forward.1']
    %8 = vsyncpa [#allocation3], 0
    %9 = vsyncpa [#allocation5], 0
    // Predicated region
    $region2: #{demo_feed_forward.1} parent=1 // pred_check
      _
    $region3: #{demo_feed_forward.1} parent=1 // pred_check_branch
      %11 = sbr.rel (0) target = $region5
    $region4: #{demo_feed_forward.1} parent=1 // pred_region
      _
    $region5: #{demo_feed_forward.1} parent=1 // pred_fallthru
      _
    // Predicated region
    $region6: #{demo_feed_forward.1} parent=1 // pred_check
      _
    $region7: #{demo_feed_forward.1} parent=1 // pred_check_branch
      %13 = sbr.rel (0) target = $region9
    $region8: #{demo_feed_forward.1} parent=1 // pred_region
      %s15 = ssub.s32 2048, 2048
      %16 = vsyncadd [#allocation3], %s15
      %s17 = sshll.u32 [#allocation2], 4
      %s18 = int_to_ptr.vmem [resolvable:$true] %s17
      %23 = dma.hbm_to_vmem [thread:$0]  %s1, 2048, %s18, [#allocation3], 128, 128, 8
    $region9: #{demo_feed_forward.1} parent=1 // pred_fallthru
      _
    // Predicated region
    $region10: #{demo_feed_forward.1} parent=1 // pred_check
      _
    $region11: #{demo_feed_forward.1} parent=1 // pred_check_branch
      %25 = sbr.rel (0) target = $region13
    $region12: #{demo_feed_forward.1} parent=1 // pred_region
      %s27 = ssub.s32 1024, 1024
      %28 = vsyncadd [#allocation5], %s27
      %s29 = sshll.u32 [#allocation4], 4
      %s30 = int_to_ptr.vmem [resolvable:$true] %s29
      %35 = dma.hbm_to_vmem [thread:$0]  %s2, 1024, %s30, [#allocation5], 64, 64, 4
    $region13: #{demo_feed_forward.1} parent=1 // pred_fallthru
      _
    // Predicated region
    $region14: #{demo_feed_forward.1} parent=1 // pred_check
      _
    $region15: #{demo_feed_forward.1} parent=1 // pred_check_branch
      %37 = sbr.rel (0) target = $region17
    $region16: #{demo_feed_forward.1} parent=1 // pred_region
      %38 = dma.done [#allocation3], 2048
    $region17: #{demo_feed_forward.1} parent=1 // pred_fallthru
      _
    // Predicated region
    $region18: #{demo_feed_forward.1} parent=1 // pred_check
      _
    $region19: #{demo_feed_forward.1} parent=1 // pred_check_branch
      %40 = sbr.rel (0) target = $region21
    $region20: #{demo_feed_forward.1} parent=1 // pred_region
      %41 = dma.done [#allocation5], 1024
    $region21: #{demo_feed_forward.1} parent=1 // pred_fallthru
      _
    %v43 = vld [vmem:[%s0] sm:$0xf]
    %v44 = vld [vmem:[%s0 + $0x4] sm:$0xf]
    %v45 = vld [vmem:[#allocation2] sm:$0xff]
    %v46 = vld [vmem:[#allocation2 + $0x8] sm:$0xff]
    %v47 = vld [vmem:[#allocation2 + $0x10] sm:$0xff]
    %v48 = vld [vmem:[#allocation2 + $0x18] sm:$0xff]
    %v49 = vld [vmem:[#allocation2 + $0x20] sm:$0xff]
    %v50 = vld [vmem:[#allocation2 + $0x28] sm:$0xff]
    %v51 = vld [vmem:[#allocation2 + $0x30] sm:$0xff]
    %v52 = vld [vmem:[#allocation2 + $0x38] sm:$0xff]
    %v53 = vld [vmem:[#allocation2 + $0x40] sm:$0xff]
    %v54 = vld [vmem:[#allocation2 + $0x48] sm:$0xff]
    %v55 = vld [vmem:[#allocation2 + $0x50] sm:$0xff]
    %v56 = vld [vmem:[#allocation2 + $0x58] sm:$0xff]
    %v57 = vld [vmem:[#allocation2 + $0x60] sm:$0xff]
    %v58 = vld [vmem:[#allocation2 + $0x68] sm:$0xff]
    %v59 = vld [vmem:[#allocation2 + $0x70] sm:$0xff]
    %v60 = vld [vmem:[#allocation2 + $0x78] sm:$0xff]
    %v63 = vunpack.c.l.b16 %v43
    %v64 = vunpack.c.l.b16 %v44
    %v65 = vpack.c.b16 %v64, %v63
    %v83 = vunpack.c.l.b16 %v45
    %v84 = vunpack.c.h.b16 %v45
    %v85 = vunpack.c.l.b16 %v46
    %v86 = vunpack.c.h.b16 %v46
    %v87 = vunpack.c.l.b16 %v47
    %v88 = vunpack.c.h.b16 %v47
    %v89 = vunpack.c.l.b16 %v48
    %v90 = vunpack.c.h.b16 %v48
    %v91 = vunpack.c.l.b16 %v49
    %v92 = vunpack.c.h.b16 %v49
    %v93 = vunpack.c.l.b16 %v50
    %v94 = vunpack.c.h.b16 %v50
    %v95 = vunpack.c.l.b16 %v51
    %v96 = vunpack.c.h.b16 %v51
    %v97 = vunpack.c.l.b16 %v52
    %v98 = vunpack.c.h.b16 %v52
    %v99 = vunpack.c.l.b16 %v53
    %v100 = vunpack.c.h.b16 %v53
    %v101 = vunpack.c.l.b16 %v54
    %v102 = vunpack.c.h.b16 %v54
    %v103 = vunpack.c.l.b16 %v55
    %v104 = vunpack.c.h.b16 %v55
    %v105 = vunpack.c.l.b16 %v56
    %v106 = vunpack.c.h.b16 %v56
    %v107 = vunpack.c.l.b16 %v57
    %v108 = vunpack.c.h.b16 %v57
    %v109 = vunpack.c.l.b16 %v58
    %v110 = vunpack.c.h.b16 %v58
    %v111 = vunpack.c.l.b16 %v59
    %v112 = vunpack.c.h.b16 %v59
    %v113 = vunpack.c.l.b16 %v60
    %v114 = vunpack.c.h.b16 %v60
    %v115 = vpack.c.b16 %v85, %v83
    %v116 = vpack.c.b16 %v86, %v84
    %v117 = vpack.c.b16 %v89, %v87
    %v118 = vpack.c.b16 %v90, %v88
    %v119 = vpack.c.b16 %v93, %v91
    %v120 = vpack.c.b16 %v94, %v92
    %v121 = vpack.c.b16 %v97, %v95
    %v122 = vpack.c.b16 %v98, %v96
    %v123 = vpack.c.b16 %v101, %v99
    %v124 = vpack.c.b16 %v102, %v100
    %v125 = vpack.c.b16 %v105, %v103
    %v126 = vpack.c.b16 %v106, %v104
    %v127 = vpack.c.b16 %v109, %v107
    %v128 = vpack.c.b16 %v110, %v108
    %v129 = vpack.c.b16 %v113, %v111
    %v130 = vpack.c.b16 %v114, %v112
    %147 = vmatprep.subr.bf16.mxu0 %v116
    %148 = vmatpush1.bf16.msra.mxu0 %v115
    %149 = vmatprep.subr.bf16.mxu0 %v118
    %150 = vmatpush1.bf16.msra.mxu0 %v117
    %151 = vmatprep.subr.bf16.mxu0 %v120
    %152 = vmatpush1.bf16.msra.mxu0 %v119
    %153 = vmatprep.subr.bf16.mxu0 %v122
    %154 = vmatpush1.bf16.msra.mxu0 %v121
    %155 = vmatprep.subr.bf16.mxu0 %v124
    %156 = vmatpush1.bf16.msra.mxu0 %v123
    %157 = vmatprep.subr.bf16.mxu0 %v126
    %158 = vmatpush1.bf16.msra.mxu0 %v125
    %159 = vmatprep.subr.bf16.mxu0 %v128
    %160 = vmatpush1.bf16.msra.mxu0 %v127
    %161 = vmatprep.subr.bf16.mxu0 %v130
    %162 = vmatpush1.bf16.msra.mxu0 %v129
    %163 = vmatprep.subr.bf16.mxu0 0
    %164 = vmatpush1.bf16.msra.mxu0 0
    %165 = vmatprep.subr.bf16.mxu0 0
    %166 = vmatpush1.bf16.msra.mxu0 0
    %167 = vmatprep.subr.bf16.mxu0 0
    %168 = vmatpush1.bf16.msra.mxu0 0
    %169 = vmatprep.subr.bf16.mxu0 0
    %170 = vmatpush1.bf16.msra.mxu0 0
    %171 = vmatprep.subr.bf16.mxu0 0
    %172 = vmatpush1.bf16.msra.mxu0 0
    %173 = vmatprep.subr.bf16.mxu0 0
    %174 = vmatpush1.bf16.msra.mxu0 0
    %175 = vmatprep.subr.bf16.mxu0 0
    %176 = vmatpush1.bf16.msra.mxu0 0
    %177 = vmatprep.subr.bf16.mxu0 0
    %178 = vmatpush1.bf16.msra.mxu0 0
    %179 = vmatprep.mubr.bf16.mxu0 0
    %180 = vmatmul.mubr.bf16.gmra.mrb[0].mxu0 %v65
    %v181 = vpop.f32.mrb[0].mxu0
    %v182 = vadd.f32 0.0, %v181
    %v183 = vpop.f32.mrb[0].mxu0
    %v184 = vadd.f32 0.0, %v183
    %v185 = vpop.f32.mrb[0].mxu0
    %v186 = vadd.f32 0.0, %v185
    %v187 = vpop.f32.mrb[0].mxu0
    %v188 = vadd.f32 0.0, %v187
    %189 = vdwg.mxu0
    %v190 = vxor.u32 %v182, 2147483648
    %v191 = vxor.u32 %v186, 2147483648
    %v192 = vmul.f32 %v190, 1.442695
    %v193 = vpow.pop %v192
    %v194 = vmul.f32 %v191, 1.442695
    %v195 = vpow.pop %v194
    %v196 = vadd.f32 %v193, 1.0
    %v197 = vadd.f32 %v195, 1.0
    %v198 = vrcp.pop %v196
    %v199 = vmul.f32 1.0, %v198
    %v200 = vrcp.pop %v197
    %v201 = vmul.f32 1.0, %v200
    %v202 = vmul.f32 %v182, %v199
    %v203 = vmul.f32 %v186, %v201
    %v204 = vmul.f32 %v202, %v184
    %v205 = vmul.f32 %v203, %v188
    %v206 = vpack.c.bf16 %v205, %v204
    %v207 = vld [vmem:[#allocation4] sm:$0xf]
    %v208 = vld [vmem:[#allocation4 + $0x4] sm:$0xf]
    %v209 = vld [vmem:[#allocation4 + $0x8] sm:$0xf]
    %v210 = vld [vmem:[#allocation4 + $0xc] sm:$0xf]
    %v211 = vld [vmem:[#allocation4 + $0x10] sm:$0xf]
    %v212 = vld [vmem:[#allocation4 + $0x14] sm:$0xf]
    %v213 = vld [vmem:[#allocation4 + $0x18] sm:$0xf]
    %v214 = vld [vmem:[#allocation4 + $0x1c] sm:$0xf]
    %v215 = vld [vmem:[#allocation4 + $0x20] sm:$0xf]
    %v216 = vld [vmem:[#allocation4 + $0x24] sm:$0xf]
    %v217 = vld [vmem:[#allocation4 + $0x28] sm:$0xf]
    %v218 = vld [vmem:[#allocation4 + $0x2c] sm:$0xf]
    %v219 = vld [vmem:[#allocation4 + $0x30] sm:$0xf]
    %v220 = vld [vmem:[#allocation4 + $0x34] sm:$0xf]
    %v221 = vld [vmem:[#allocation4 + $0x38] sm:$0xf]
    %v222 = vld [vmem:[#allocation4 + $0x3c] sm:$0xf]
    %v239 = vunpack.c.l.b16 %v207
    %v240 = vunpack.c.l.b16 %v208
    %v241 = vunpack.c.l.b16 %v209
    %v242 = vunpack.c.l.b16 %v210
    %v243 = vunpack.c.l.b16 %v211
    %v244 = vunpack.c.l.b16 %v212
    %v245 = vunpack.c.l.b16 %v213
    %v246 = vunpack.c.l.b16 %v214
    %v247 = vunpack.c.l.b16 %v215
    %v248 = vunpack.c.l.b16 %v216
    %v249 = vunpack.c.l.b16 %v217
    %v250 = vunpack.c.l.b16 %v218
    %v251 = vunpack.c.l.b16 %v219
    %v252 = vunpack.c.l.b16 %v220
    %v253 = vunpack.c.l.b16 %v221
    %v254 = vunpack.c.l.b16 %v222
    %v255 = vpack.c.b16 %v240, %v239
    %v256 = vpack.c.b16 %v242, %v241
    %v257 = vpack.c.b16 %v244, %v243
    %v258 = vpack.c.b16 %v246, %v245
    %v259 = vpack.c.b16 %v248, %v247
    %v260 = vpack.c.b16 %v250, %v249
    %v261 = vpack.c.b16 %v252, %v251
    %v262 = vpack.c.b16 %v254, %v253
    %271 = vmatprep.subr.bf16.mxu0 0
    %272 = vmatpush1.bf16.msra.mxu0 %v255
    %273 = vmatprep.subr.bf16.mxu0 0
    %274 = vmatpush1.bf16.msra.mxu0 %v256
    %275 = vmatprep.subr.bf16.mxu0 0
    %276 = vmatpush1.bf16.msra.mxu0 %v257
    %277 = vmatprep.subr.bf16.mxu0 0
    %278 = vmatpush1.bf16.msra.mxu0 %v258
    %279 = vmatprep.subr.bf16.mxu0 0
    %280 = vmatpush1.bf16.msra.mxu0 %v259
    %281 = vmatprep.subr.bf16.mxu0 0
    %282 = vmatpush1.bf16.msra.mxu0 %v260
    %283 = vmatprep.subr.bf16.mxu0 0
    %284 = vmatpush1.bf16.msra.mxu0 %v261
    %285 = vmatprep.subr.bf16.mxu0 0
    %286 = vmatpush1.bf16.msra.mxu0 %v262
    %287 = vmatprep.subr.bf16.mxu0 0
    %288 = vmatpush1.bf16.msra.mxu0 0
    %289 = vmatprep.subr.bf16.mxu0 0
    %290 = vmatpush1.bf16.msra.mxu0 0
    %291 = vmatprep.subr.bf16.mxu0 0
    %292 = vmatpush1.bf16.msra.mxu0 0
    %293 = vmatprep.subr.bf16.mxu0 0
    %294 = vmatpush1.bf16.msra.mxu0 0
    %295 = vmatprep.subr.bf16.mxu0 0
    %296 = vmatpush1.bf16.msra.mxu0 0
    %297 = vmatprep.subr.bf16.mxu0 0
    %298 = vmatpush1.bf16.msra.mxu0 0
    %299 = vmatprep.subr.bf16.mxu0 0
    %300 = vmatpush1.bf16.msra.mxu0 0
    %301 = vmatprep.subr.bf16.mxu0 0
    %302 = vmatpush1.bf16.msra.mxu0 0
    %303 = vmatprep.mubr.bf16.mxu0 0
    %304 = vmatmul.mubr.bf16.gmra.mrb[0].mxu0 %v206
    %v305 = vpop.f32.mrb[0].mxu0
    %v306 = vadd.f32 0.0, %v305
    %v307 = vpop.f32.mrb[0].mxu0
    %v308 = vpop.f32.mrb[0].mxu0
    %v309 = vadd.f32 0.0, %v308
    %v310 = vpop.f32.mrb[0].mxu0
    %311 = vdwg.mxu0
    %312 = vst [vmem:[%s3] sm:$0xff] %v306
    %313 = vst [vmem:[%s3 + $0x8] sm:$0xff] %v309
    // Predicated region
    $region22: #{demo_feed_forward.1} parent=1 // pred_check
      _
    $region23: #{demo_feed_forward.1} parent=1 // pred_check_branch
      %315 = sbr.rel (0) target = $region25
    $region24: #{demo_feed_forward.1} parent=1 // pred_region
      _
    $region25: #{demo_feed_forward.1} parent=1 // pred_fallthru
      _
    // Predicated region
    $region26: #{demo_feed_forward.1} parent=1 // pred_check
      _
    $region27: #{demo_feed_forward.1} parent=1 // pred_check_branch
      %317 = sbr.rel (0) target = $region29
    $region28: #{demo_feed_forward.1} parent=1 // pred_region
      _
    $region29: #{demo_feed_forward.1} parent=1 // pred_fallthru
      _
    %318 = vsyncpa [#allocation3], 1
    %319 = vsyncpa [#allocation5], 1

</llo_original>
